<compile_context>
chip_gen: v6e
topology: v6e:2x2x1
jax: 0.10.0
libtpu: 0.0.40
codegen_flags: <defaults>
</compile_context>

<pallas_src>
import functools

import jax
import jax.numpy as jnp
from jax.experimental import pallas as pl
from jax.experimental.pallas import tpu as pltpu

_AUTO = object()


# --------------------------------------------------------------------------
# helpers
# --------------------------------------------------------------------------
def _round_up(x, m):
    return ((x + m - 1) // m) * m


def _vmem_capacity_bytes():
    try:
        info = pltpu.get_tpu_info()
        cap = getattr(info, "vmem_capacity_bytes", None)
        if cap:
            return int(cap)
    except Exception:
        pass
    return 64 * 1024 * 1024  # conservative default (v7x per-TensorCore)


def _vmem_bytes_needed(tm, th, dim, act_sz, w_sz, out_sz, need_scratch):
    b = tm * dim * act_sz                        # x tile     (single-buffered)
    b += tm * dim * out_sz                       # output tile(single-buffered)
    if need_scratch:
        b += tm * dim * 4                        # f32 accumulator scratch
    b += 2 * (dim * 2 * th + th * dim) * w_sz    # streamed weight blocks (x2 buffers)
    b += tm * 2 * th * 4                         # fused gate/up f32 intermediate
    return b


def _choose_tiles(M, dim, hidden_p, act_sz, w_sz, out_sz, need_scratch,
                  vmem_cap, tm=None, th=None):
    budget = int(vmem_cap * 0.80)
    tm_cap = min(1024, max(8, _round_up(M, 8)))
    if tm is not None:
        tm_cands = [tm]
    else:
        tm_cands = [t for t in (1024, 512, 256, 128) if t <= tm_cap] or [tm_cap]
    if th is not None:
        th_cands = [th]
    else:
        th_cands = [c for c in (512, 256, 128) if hidden_p % c == 0] or [128]
    for tmc in tm_cands:                 # prioritize large tm (arithmetic intensity)
        for thc in th_cands:
            if _vmem_bytes_needed(tmc, thc, dim, act_sz, w_sz, out_sz,
                                  need_scratch) <= budget:
                return tmc, thc
    return tm_cands[-1], th_cands[-1]


def _io_block_spec(shape, index_map, single_buffer):
    # x / output block indices are constant along the hidden (k) axis, so a
    # single buffer suffices; saves 2*tm*dim*itemsize of VMEM.
    if single_buffer:
        try:
            return pl.BlockSpec(shape, index_map, pipeline_mode=pl.Buffered(1))
        except Exception:  # older jax: no pipeline_mode / Buffered
            pass
    return pl.BlockSpec(shape, index_map)


# --------------------------------------------------------------------------
# kernels
# --------------------------------------------------------------------------
def _swiglu_kernel_f32out(x_ref, w12_ref, w3t_ref, o_ref):
    # f32 output: accumulate directly into the resident output block.
    k = pl.program_id(1)

    @pl.when(k == 0)
    def _init():
        o_ref[...] = jnp.zeros_like(o_ref)

    th = w3t_ref.shape[0]
    # One fused MXU call for both gate/up projections of this hidden block.
    h12 = jnp.dot(x_ref[...], w12_ref[...], preferred_element_type=jnp.float32)
    h1 = h12[:, :th]
    h2 = h12[:, th:]
    gate = h2 * jax.nn.sigmoid(h2)               # SiLU in f32 (VPU + EUP)
    h = (h1 * gate).astype(w3t_ref.dtype)
    o_ref[...] += jnp.dot(h, w3t_ref[...], preferred_element_type=jnp.float32)


def _swiglu_kernel_scratch(x_ref, w12_ref, w3t_ref, o_ref, acc_ref):
    # Narrow output dtype: accumulate in f32 scratch, cast once at the end.
    k = pl.program_id(1)

    @pl.when(k == 0)
    def _init():
        acc_ref[...] = jnp.zeros_like(acc_ref)

    th = w3t_ref.shape[0]
    h12 = jnp.dot(x_ref[...], w12_ref[...], preferred_element_type=jnp.float32)
    h1 = h12[:, :th]
    h2 = h12[:, th:]
    gate = h2 * jax.nn.sigmoid(h2)
    h = (h1 * gate).astype(w3t_ref.dtype)
    acc_ref[...] += jnp.dot(h, w3t_ref[...], preferred_element_type=jnp.float32)

    @pl.when(k == pl.num_programs(1) - 1)
    def _finalize():
        o_ref[...] = acc_ref[...].astype(o_ref.dtype)


# --------------------------------------------------------------------------
# weight preparation (ONE-TIME; cache the result across calls)
# --------------------------------------------------------------------------
def prepare_swiglu_weights(w1, w2, w3, *, th, compute_dtype=None):
    """Fuse + block the SwiGLU weights once.

    w1, w2 : (hidden, dim)   PyTorch nn.Linear(dim, hidden, bias=False) weights
    w3     : (dim, hidden)   PyTorch nn.Linear(hidden, dim, bias=False) weight
    Returns
      w12 : (nh, dim, 2*th)  block-contiguous [w1.T | w2.T] hidden blocks
      w3t : (nh, th, dim)    block-contiguous w3.T hidden blocks
    hidden is zero-padded to a multiple of th (exact zeros through SiLU).
    """
    hidden, dim = w1.shape
    if compute_dtype is not None:
        w1 = w1.astype(compute_dtype)
        w2 = w2.astype(compute_dtype)
        w3 = w3.astype(compute_dtype)
    hidden_p = _round_up(hidden, th)
    if hidden_p != hidden:
        pad = hidden_p - hidden
        w1 = jnp.pad(w1, ((0, pad), (0, 0)))
        w2 = jnp.pad(w2, ((0, pad), (0, 0)))
        w3 = jnp.pad(w3, ((0, 0), (0, pad)))
    nh = hidden_p // th
    w1t = jnp.transpose(w1.reshape(nh, th, dim), (0, 2, 1))   # (nh, dim, th)
    w2t = jnp.transpose(w2.reshape(nh, th, dim), (0, 2, 1))   # (nh, dim, th)
    w12 = jnp.concatenate([w1t, w2t], axis=2)                 # (nh, dim, 2*th)
    w3t = jnp.transpose(w3).reshape(nh, th, dim)              # (nh, th, dim)
    return w12, w3t


# --------------------------------------------------------------------------
# main entry points
# --------------------------------------------------------------------------
def swiglu_prefused(x, w12, w3t, *, tm=None, out_dtype=None,
                    vmem_limit_bytes=None, single_buffer_io=True):
    """SwiGLU forward from pre-fused weights (see prepare_swiglu_weights)."""
    b, s, dim = x.shape
    nh, dim_w, two_th = w12.shape
    assert dim_w == dim
    th = two_th // 2
    assert w3t.shape == (nh, th, dim)
    out_dtype = jnp.dtype(x.dtype if out_dtype is None else out_dtype)
    need_scratch = out_dtype != jnp.dtype(jnp.float32)

    M = b * s
    x2d = x.reshape(M, dim).astype(w12.dtype)

    act_sz = jnp.dtype(w12.dtype).itemsize
    out_sz = out_dtype.itemsize
    vmem_cap = _vmem_capacity_bytes()
    tm, _ = _choose_tiles(M, dim, nh * th, act_sz, act_sz, out_sz,
                          need_scratch, vmem_cap, tm=tm, th=th)

    Mp = _round_up(M, tm)
    if Mp != M:
        # Padded rows are exact zeros through SiLU and dropped below.
        x2d = jnp.pad(x2d, ((0, Mp - M), (0, 0)))

    est = _vmem_bytes_needed(tm, th, dim, act_sz, act_sz, out_sz, need_scratch)
    if vmem_limit_bytes is None:
        vmem_limit_bytes = int(min(max(est * 5 // 4, 32 * 1024 * 1024),
                                   vmem_cap * 9 // 10))

    if need_scratch:
        kernel = _swiglu_kernel_scratch
        scratch_shapes = (pltpu.VMEM((tm, dim), jnp.float32),)
    else:
        kernel = _swiglu_kernel_f32out
        scratch_shapes = ()

    out2d = pl.pallas_call(
        kernel,
        out_shape=jax.ShapeDtypeStruct((Mp, dim), out_dtype),
        grid_spec=pltpu.PrefetchScalarGridSpec(
            num_scalar_prefetch=0,
            grid=(Mp // tm, nh),  # rows outer (parallel), hidden inner (reduction)
            in_specs=[
                _io_block_spec((tm, dim), lambda i, k: (i, 0), single_buffer_io),
                # Block-contiguous streamed weights; leading block dim squeezed.
                pl.BlockSpec((None, dim, 2 * th), lambda i, k: (k, 0, 0)),
                pl.BlockSpec((None, th, dim), lambda i, k: (k, 0, 0)),
            ],
            out_specs=_io_block_spec((tm, dim), lambda i, k: (i, 0),
                                     single_buffer_io),
            scratch_shapes=scratch_shapes,
        ),
        compiler_params=pltpu.CompilerParams(
            dimension_semantics=("parallel", "arbitrary"),
            vmem_limit_bytes=vmem_limit_bytes,
        ),
    )(x2d, w12, w3t)

    return out2d[:M].reshape(b, s, dim)


def swiglu(x, w1, w2, w3, *, tm=None, th=None, compute_dtype=_AUTO):
    """Convenience wrapper that fuses the weights per call.

    For production, call prepare_swiglu_weights ONCE, cache its result, and
    call swiglu_prefused -- the per-call transpose/concat here re-reads and
    rewrites ~3*dim*hidden weight elements of HBM on every invocation.
    """
    b, s, dim = x.shape
    hidden = w1.shape[0]
    out_dtype = x.dtype
    if compute_dtype is _AUTO:
        # bf16 MXU operands by default on all generations (halves streamed
        # weight bytes; gate math + accumulation stay f32 in-kernel).
        compute_dtype = (jnp.bfloat16
                         if x.dtype == jnp.dtype(jnp.float32) else x.dtype)
    cdt = jnp.dtype(x.dtype) if compute_dtype is None else jnp.dtype(compute_dtype)

    act_sz = cdt.itemsize
    out_sz = jnp.dtype(out_dtype).itemsize
    need_scratch = jnp.dtype(out_dtype) != jnp.dtype(jnp.float32)
    vmem_cap = _vmem_capacity_bytes()
    hidden_p = _round_up(hidden, 128)
    tm, th = _choose_tiles(b * s, dim, hidden_p, act_sz, act_sz, out_sz,
                           need_scratch, vmem_cap, tm=tm, th=th)
    w12, w3t = prepare_swiglu_weights(w1, w2, w3, th=th,
                                      compute_dtype=compute_dtype)
    return swiglu_prefused(x, w12, w3t, tm=tm, out_dtype=out_dtype)


# --------------------------------------------------------------------------
# reference + tests
# --------------------------------------------------------------------------
def _reference(x, w1, w2, w3):
    x = x.astype(jnp.float32)
    w1 = w1.astype(jnp.float32)
    w2 = w2.astype(jnp.float32)
    w3 = w3.astype(jnp.float32)
    h1 = x @ w1.T
    h2 = x @ w2.T
    return (h1 * (h2 * jax.nn.sigmoid(h2))) @ w3.T


def _check(out, ref, rel, name):
    out = jnp.asarray(out, jnp.float32)
    ref = jnp.asarray(ref, jnp.float32)
    err = float(jnp.max(jnp.abs(out - ref)))
    scale = float(jnp.max(jnp.abs(ref))) + 1e-6
    assert err <= rel * scale, f"{name}: max-err {err} vs scale {scale}"


if __name__ == "__main__":
    key = jax.random.PRNGKey(0)

    # ---- test 1: small shapes, forced f32 compute (tight check) ------------
    batch, seq, dim, hidden = 2, 8, 32, 64
    kx, k1, k2, k3, key = jax.random.split(key, 5)
    x = jax.random.normal(kx, (batch, seq, dim), dtype=jnp.float32)
    w1 = jax.random.normal(k1, (hidden, dim), dtype=jnp.float32) * 0.1
    w2 = jax.random.normal(k2, (hidden, dim), dtype=jnp.float32) * 0.1
    w3 = jax.random.normal(k3, (dim, hidden), dtype=jnp.float32) * 0.1

    out = jax.block_until_ready(swiglu(x, w1, w2, w3, compute_dtype=jnp.float32))
    assert out.shape == (batch, seq, dim)
    _check(out, _reference(x, w1, w2, w3), 1e-4, "f32 compute")

    # ---- test 2: default bf16-operand path (loose check) -------------------
    out_bf = jax.block_until_ready(swiglu(x, w1, w2, w3))
    _check(out_bf, _reference(x, w1, w2, w3), 3e-2, "bf16 compute")

    # ---- test 3: M not divisible by the row tile (padding path) ------------
    kx2, key = jax.random.split(key, 2)
    x_odd = jax.random.normal(kx2, (2, 7, dim), dtype=jnp.float32)   # M = 14
    out_odd = jax.block_until_ready(
        swiglu(x_odd, w1, w2, w3, compute_dtype=jnp.float32))
    assert out_odd.shape == (2, 7, dim)
    _check(out_odd, _reference(x_odd, w1, w2, w3), 1e-4, "row padding")

    # ---- test 4: production path -- prepare once, stream hidden blocks -----
    dim2, hidden2 = 128, 256
    kx3, k13, k23, k33, key = jax.random.split(key, 5)
    x3 = jax.random.normal(kx3, (2, 64, dim2), dtype=jnp.float32)    # M = 128
    w13 = jax.random.normal(k13, (hidden2, dim2), dtype=jnp.float32) * 0.05
    w23 = jax.random.normal(k23, (hidden2, dim2), dtype=jnp.float32) * 0.05
    w33 = jax.random.normal(k33, (dim2, hidden2), dtype=jnp.float32) * 0.05
    # One-time fusion (th=128 -> 2 streamed hidden blocks), cached thereafter.
    w12, w3t = prepare_swiglu_weights(w13, w23, w33, th=128,
                                      compute_dtype=jnp.float32)
    ff = jax.jit(functools.partial(swiglu_prefused, out_dtype=jnp.float32))
    out3 = jax.block_until_ready(ff(x3, w12, w3t))
    jax.block_until_ready(ff(x3, w12, w3t))   # reuse cached fused weights
    assert out3.shape == (2, 64, dim2)
    _check(out3, _reference(x3, w13, w23, w33), 1e-4, "streamed k")

    # ---- test 5: bf16 in / bf16 out (f32 scratch accumulator path) ---------
    xb = x3.astype(jnp.bfloat16)
    w12b, w3tb = prepare_swiglu_weights(w13.astype(jnp.bfloat16),
                                        w23.astype(jnp.bfloat16),
                                        w33.astype(jnp.bfloat16), th=128)
    outb = jax.block_until_ready(swiglu_prefused(xb, w12b, w3tb))
    assert outb.dtype == jnp.bfloat16
    _check(outb,
           _reference(xb, w13.astype(jnp.bfloat16),
                      w23.astype(jnp.bfloat16), w33.astype(jnp.bfloat16)),
           4e-2, "bf16 scratch")

    print("KERNEL_OK")
</pallas_src>

<mosaic_0001>
module attributes {stable_mosaic.version = 11 : i64} {
  func.func @_swiglu_kernel_f32out(%arg0: i32, %arg1: i32, %arg2: memref<16x32xf32, #tpu.memory_space<vmem>>, %arg3: memref<1x32x256xf32, #tpu.memory_space<vmem>>, %arg4: memref<1x128x32xf32, #tpu.memory_space<vmem>>, %arg5: memref<16x32xf32, #tpu.memory_space<vmem>>) attributes {dimension_semantics = [#tpu.dimension_semantics<parallel>, #tpu.dimension_semantics<arbitrary>], iteration_bounds = array<i64: 1, 1>, scalar_prefetch = 0 : i64, scratch_operands = 0 : i64, tpu.core_type = #tpu.core_type<tc>, window_params = [{pipeline_mode = #tpu.pipeline_mode<synchronous>, transform_indices = @transform_0, window_bounds = array<i64: 16, 32>}, {transform_indices = @transform_1, window_bounds = array<i64: 1, 32, 256>}, {transform_indices = @transform_2, window_bounds = array<i64: 1, 128, 32>}, {pipeline_mode = #tpu.pipeline_mode<synchronous>, transform_indices = @transform_3, window_bounds = array<i64: 16, 32>}]} {
    %c0_i32 = arith.constant 0 : i32
    %0 = arith.cmpi eq, %arg1, %c0_i32 : i32
    %1 = arith.extui %0 : i1 to i32
    %c0_i32_0 = arith.constant 0 : i32
    %2 = arith.cmpi ne, %1, %c0_i32_0 : i32
    scf.if %2 {
      %cst_14 = arith.constant 0.000000e+00 : f32
      %22 = vector.broadcast %cst_14 : f32 to vector<16x32xf32>
      %c0_15 = arith.constant 0 : index
      %c0_16 = arith.constant 0 : index
      %23 = vector.load %arg5[%c0_15, %c0_16] : memref<16x32xf32, #tpu.memory_space<vmem>>, vector<16x32xf32>
      tpu.vector_store %arg5[%c0_15, %c0_16], %22 {strides = array<i32>} : memref<16x32xf32, #tpu.memory_space<vmem>>, vector<16x32xf32>,
    } else {
    }
    %c0 = arith.constant 0 : index
    %c0_1 = arith.constant 0 : index
    %3 = vector.load %arg2[%c0, %c0_1] : memref<16x32xf32, #tpu.memory_space<vmem>>, vector<16x32xf32>
    %c0_2 = arith.constant 0 : index
    %c0_3 = arith.constant 0 : index
    %c0_4 = arith.constant 0 : index
    %4 = vector.load %arg3[%c0_2, %c0_3, %c0_4] : memref<1x32x256xf32, #tpu.memory_space<vmem>>, vector<1x32x256xf32>
    %5 = vector.shape_cast %4 : vector<1x32x256xf32> to vector<32x256xf32>
    %cst = arith.constant dense<0.000000e+00> : vector<16x256xf32>
    %6 = tpu.matmul %3, %5, %cst {dimension_numbers = #tpu.dot_dimension_numbers<[1], [0], [0], [1], [0, 0, 1, 1], [], []>} : vector<16x32xf32>, vector<32x256xf32>, vector<16x256xf32> -> vector<16x256xf32>
    %7 = vector.extract_strided_slice %6 {offsets = [0, 0], sizes = [16, 128], strides = [1, 1]} : vector<16x256xf32> to vector<16x128xf32>
    %8 = vector.extract_strided_slice %6 {offsets = [0, 128], sizes = [16, 128], strides = [1, 1]} : vector<16x256xf32> to vector<16x128xf32>
    %9 = arith.negf %8 : vector<16x128xf32>
    %10 = math.exp %9 : vector<16x128xf32>
    %cst_5 = arith.constant 1.000000e+00 : f32
    %11 = vector.broadcast %cst_5 : f32 to vector<16x128xf32>
    %12 = arith.addf %11, %10 : vector<16x128xf32>
    %13 = arith.divf %11, %12 : vector<16x128xf32>
    %14 = arith.mulf %8, %13 : vector<16x128xf32>
    %15 = arith.mulf %7, %14 : vector<16x128xf32>
    %c0_6 = arith.constant 0 : index
    %c0_7 = arith.constant 0 : index
    %16 = vector.load %arg5[%c0_6, %c0_7] : memref<16x32xf32, #tpu.memory_space<vmem>>, vector<16x32xf32>
    %c0_8 = arith.constant 0 : index
    %c0_9 = arith.constant 0 : index
    %c0_10 = arith.constant 0 : index
    %17 = vector.load %arg4[%c0_8, %c0_9, %c0_10] : memref<1x128x32xf32, #tpu.memory_space<vmem>>, vector<1x128x32xf32>
    %18 = vector.shape_cast %17 : vector<1x128x32xf32> to vector<128x32xf32>
    %cst_11 = arith.constant dense<0.000000e+00> : vector<16x32xf32>
    %19 = tpu.matmul %15, %18, %cst_11 {dimension_numbers = #tpu.dot_dimension_numbers<[1], [0], [0], [1], [0, 0, 1, 1], [], []>} : vector<16x128xf32>, vector<128x32xf32>, vector<16x32xf32> -> vector<16x32xf32>
    %20 = arith.addf %16, %19 : vector<16x32xf32>
    %c0_12 = arith.constant 0 : index
    %c0_13 = arith.constant 0 : index
    %21 = vector.load %arg5[%c0_12, %c0_13] : memref<16x32xf32, #tpu.memory_space<vmem>>, vector<16x32xf32>
    tpu.vector_store %arg5[%c0_12, %c0_13], %20 {strides = array<i32>} : memref<16x32xf32, #tpu.memory_space<vmem>>, vector<16x32xf32>,
    return
  }
  func.func @transform_0(%arg0: i32, %arg1: i32) -> (i32, i32) {
    %c0_i32 = arith.constant 0 : i32
    %c0_i32_0 = arith.constant 0 : i32
    return %arg0, %c0_i32 : i32, i32
  }
  func.func @transform_1(%arg0: i32, %arg1: i32) -> (i32, i32, i32) {
    %c0_i32 = arith.constant 0 : i32
    %c0_i32_0 = arith.constant 0 : i32
    %c0_i32_1 = arith.constant 0 : i32
    return %arg1, %c0_i32, %c0_i32_0 : i32, i32, i32
  }
  func.func @transform_2(%arg0: i32, %arg1: i32) -> (i32, i32, i32) {
    %c0_i32 = arith.constant 0 : i32
    %c0_i32_0 = arith.constant 0 : i32
    %c0_i32_1 = arith.constant 0 : i32
    return %arg1, %c0_i32, %c0_i32_0 : i32, i32, i32
  }
  func.func @transform_3(%arg0: i32, %arg1: i32) -> (i32, i32) {
    %c0_i32 = arith.constant 0 : i32
    %c0_i32_0 = arith.constant 0 : i32
    return %arg0, %c0_i32 : i32, i32
  }
}

</mosaic_0001>

<llo_original>
// kernel: tpu_custom_call.1
$region0: #{tpu_custom_call.1}
  #allocation0 [shape = 'u32[]', space=smem, size = 0x4, offset = 0x4, fixed_abs, tag = 'smem constant byte address 0x4 - core index']
  #allocation1 [shape = 'u32[144,128]{1,0:T(1,128)}', space=vmem, size = 0x12000, scoped, tag = 'internal scratch']
  %s0 = inlined_call_operand.vmem [shape: f32[16,32], index: 0, kind: input, shape index: {}]
  %s1 = inlined_call_operand.vmem [shape: f32[1,32,256], index: 1, kind: input, shape index: {}]
  %s2 = inlined_call_operand.vmem [shape: f32[1,128,32], index: 2, kind: input, shape index: {}]
  %s3 = inlined_call_operand.hbm [shape: f32[16,32], index: 3, kind: output, shape index: {}]
  %s4 = sld [smem:[#allocation0]]
  $region26: #{tpu_custom_call.1} parent=0
    _
  %s6 = ssub.s32 1, %s4
  %s7 = scalar_select 0, %s6, %s4
  $region1: #{tpu_custom_call.1} parent=0
    #allocation2 [shape = 'u8[8192]{0}', space=vmem, size = 0x2000, scoped, tag = 'output window, operand 0, single buffered']
    #allocation3 [shape = 's32[1]{0}', space=sflag, size = 0x4, scoped, tag = 'scoped memory for tpu_custom_call.1']
    %8 = vsyncpa [#allocation3], 0
    // Predicated region
    $region2: #{tpu_custom_call.1} parent=1 // pred_check
      _
    $region3: #{tpu_custom_call.1} parent=1 // pred_check_branch
      %10 = sbr.rel (0) target = $region5
    $region4: #{tpu_custom_call.1} parent=1 // pred_region
      _
    $region5: #{tpu_custom_call.1} parent=1 // pred_fallthru
      _
    // Predicated region
    $region6: #{tpu_custom_call.1} parent=1 // pred_check
      _
    $region7: #{tpu_custom_call.1} parent=1 // pred_check_branch
      %12 = sbr.rel (0) target = $region9
    $region8: #{tpu_custom_call.1} parent=1 // pred_region
      _
    $region9: #{tpu_custom_call.1} parent=1 // pred_fallthru
      _
    // Predicated region
    $region10: #{tpu_custom_call.1} parent=1 // pred_check
      _
    $region11: #{tpu_custom_call.1} parent=1 // pred_check_branch
      %14 = sbr.rel (0) target = $region13
    $region12: #{tpu_custom_call.1} parent=1 // pred_region
      _
    $region13: #{tpu_custom_call.1} parent=1 // pred_fallthru
      _
    %p15 = scmp.eq.s32.totalorder 0, 0
    // Predicated region
    $region14: #{tpu_custom_call.1} parent=1 // pred_check
      %p16 = pneg %p15
    $region15: #{tpu_custom_call.1} parent=1 // pred_check_branch
      %18 = sbr.rel (%p16) target = $region17
    $region16: #{tpu_custom_call.1} parent=1 // pred_region
      %vm19 = vcmask 261120
      %20 = vst.msk [vmem:[#allocation2] sm:$0xff] %vm19, 0.0
      %21 = vst.msk [vmem:[#allocation2 + $0x8] sm:$0xff] %vm19, 0.0
    $region17: #{tpu_custom_call.1} parent=1 // pred_fallthru
      _
    %v22 = vld [vmem:[%s0] sm:$0xff]
    %v23 = vld [vmem:[%s0 + $0x8] sm:$0xff]
    %v24 = vld [vmem:[%s1] sm:$0xff]
    %v25 = vld [vmem:[%s1 + $0x8] sm:$0xff]
    %v26 = vld [vmem:[%s1 + $0x10] sm:$0xff]
    %v27 = vld [vmem:[%s1 + $0x18] sm:$0xff]
    %v28 = vld [vmem:[%s1 + $0x20] sm:$0xff]
    %v29 = vld [vmem:[%s1 + $0x28] sm:$0xff]
    %v30 = vld [vmem:[%s1 + $0x30] sm:$0xff]
    %v31 = vld [vmem:[%s1 + $0x38] sm:$0xff]
    %vm32 = vcmask 261120
    %v34 = vsel %vm32, %v22, 0
    %v37 = vsel %vm32, %v23, 0
    %39 = vmatprep.subr.mxu0 0.0
    %40 = vmatpush1.msra.mxu0 0.0
    %41 = vmatprep.subr.mxu0 0.0
    %42 = vmatpush1.msra.mxu0 0.0
    %43 = vmatprep.subr.mxu0 0.0
    %44 = vmatpush1.msra.mxu0 0.0
    %45 = vmatprep.subr.mxu0 0.0
    %46 = vmatpush1.msra.mxu0 0.0
    %47 = vmatprep.subr.mxu0 0.0
    %48 = vmatpush1.msra.mxu0 0.0
    %49 = vmatprep.subr.mxu0 0.0
    %50 = vmatpush1.msra.mxu0 0.0
    %51 = vmatprep.subr.mxu0 0.0
    %52 = vmatpush1.msra.mxu0 0.0
    %53 = vmatprep.subr.mxu0 0.0
    %54 = vmatpush1.msra.mxu0 0.0
    %55 = vmatprep.subr.mxu0 0.0
    %56 = vmatpush1.msra.mxu0 0.0
    %57 = vmatprep.subr.mxu0 0.0
    %58 = vmatpush1.msra.mxu0 0.0
    %59 = vmatprep.subr.mxu0 0.0
    %60 = vmatpush1.msra.mxu0 0.0
    %61 = vmatprep.subr.mxu0 0.0
    %62 = vmatpush1.msra.mxu0 0.0
    %63 = vmatprep.subr.mxu0 %v31
    %64 = vmatpush1.msra.mxu0 %v30
    %65 = vmatprep.subr.mxu0 %v29
    %66 = vmatpush1.msra.mxu0 %v28
    %67 = vmatprep.subr.mxu0 %v27
    %68 = vmatpush1.msra.mxu0 %v26
    %69 = vmatprep.subr.mxu0 %v25
    %70 = vmatpush1.msra.mxu0 %v24
    %71 = vmatprep.subr.mxu0 0.0
    %72 = vmatpush2.msra.mxu0 0.0
    %73 = vmatprep.subr.mxu0 0.0
    %74 = vmatpush2.msra.mxu0 0.0
    %75 = vmatprep.subr.mxu0 0.0
    %76 = vmatpush2.msra.mxu0 0.0
    %77 = vmatprep.subr.mxu0 0.0
    %78 = vmatpush2.msra.mxu0 0.0
    %79 = vmatprep.subr.mxu0 0.0
    %80 = vmatpush2.msra.mxu0 0.0
    %81 = vmatprep.subr.mxu0 0.0
    %82 = vmatpush2.msra.mxu0 0.0
    %83 = vmatprep.subr.mxu0 0.0
    %84 = vmatpush2.msra.mxu0 0.0
    %85 = vmatprep.subr.mxu0 0.0
    %86 = vmatpush2.msra.mxu0 0.0
    %87 = vmatprep.subr.mxu0 0.0
    %88 = vmatpush2.msra.mxu0 0.0
    %89 = vmatprep.subr.mxu0 0.0
    %90 = vmatpush2.msra.mxu0 0.0
    %91 = vmatprep.subr.mxu0 0.0
    %92 = vmatpush2.msra.mxu0 0.0
    %93 = vmatprep.subr.mxu0 0.0
    %94 = vmatpush2.msra.mxu0 0.0
    %95 = vmatprep.subr.mxu0 0.0
    %96 = vmatpush2.msra.mxu0 0.0
    %97 = vmatprep.subr.mxu0 0.0
    %98 = vmatpush2.msra.mxu0 0.0
    %99 = vmatprep.subr.mxu0 0.0
    %100 = vmatpush2.msra.mxu0 0.0
    %101 = vmatprep.subr.mxu0 0.0
    %102 = vmatpush2.msra.mxu0 0.0
    %103 = vmatprep.mubr.f32.mxu0 0.0
    %104 = vmatmul.mubr.f32.gmra.mxu0 %v34
    %v105 = vpop.f32.mrf.mxu0
    %v106 = vadd.f32 0.0, %v105
    %v107 = vpop.f32.mrf.mxu0
    %v108 = vadd.f32 0.0, %v107
    %109 = vmatprep.mubr.f32.mxu0 0.0
    %110 = vmatmul.mubr.f32.gmra.mxu0 %v37
    %v111 = vpop.f32.mrf.mxu0
    %v112 = vadd.f32 0.0, %v111
    %v113 = vpop.f32.mrf.mxu0
    %v114 = vadd.f32 0.0, %v113
    %115 = vdwg.mxu0
    %v116 = vxor.u32 %v108, 2147483648
    %v117 = vxor.u32 %v114, 2147483648
    %v118 = vmul.f32 %v116, 1.442695
    %v119 = vpow.pop %v118
    %v120 = vmul.f32 %v117, 1.442695
    %v121 = vpow.pop %v120
    %v122 = vadd.f32 %v119, 1.0
    %v123 = vadd.f32 %v121, 1.0
    %v124 = vrcp.pop %v122
    %v125 = vmul.f32 1.0, %v124
    %v126 = vrcp.pop %v123
    %v127 = vmul.f32 1.0, %v126
    %v128 = vmul.f32 %v108, %v125
    %v129 = vmul.f32 %v114, %v127
    %v130 = vmul.f32 %v106, %v128
    %v131 = vmul.f32 %v112, %v129
    %v132 = vld [vmem:[#allocation2] sm:$0xff]
    %v133 = vld [vmem:[#allocation2 + $0x8] sm:$0xff]
    %v134 = vld [vmem:[%s2] sm:$0xff]
    %v135 = vld [vmem:[%s2 + $0x8] sm:$0xff]
    %v136 = vld [vmem:[%s2 + $0x10] sm:$0xff]
    %v137 = vld [vmem:[%s2 + $0x18] sm:$0xff]
    %v138 = vld [vmem:[%s2 + $0x20] sm:$0xff]
    %v139 = vld [vmem:[%s2 + $0x28] sm:$0xff]
    %v140 = vld [vmem:[%s2 + $0x30] sm:$0xff]
    %v141 = vld [vmem:[%s2 + $0x38] sm:$0xff]
    %v142 = vld [vmem:[%s2 + $0x40] sm:$0xff]
    %v143 = vld [vmem:[%s2 + $0x48] sm:$0xff]
    %v144 = vld [vmem:[%s2 + $0x50] sm:$0xff]
    %v145 = vld [vmem:[%s2 + $0x58] sm:$0xff]
    %v146 = vld [vmem:[%s2 + $0x60] sm:$0xff]
    %v147 = vld [vmem:[%s2 + $0x68] sm:$0xff]
    %v148 = vld [vmem:[%s2 + $0x70] sm:$0xff]
    %v149 = vld [vmem:[%s2 + $0x78] sm:$0xff]
    %150 = vmatprep.subr.mxu0 0.0
    %151 = vmatpush1.msra.mxu0 %v149
    %152 = vmatprep.subr.mxu0 0.0
    %153 = vmatpush1.msra.mxu0 %v148
    %154 = vmatprep.subr.mxu0 0.0
    %155 = vmatpush1.msra.mxu0 %v147
    %156 = vmatprep.subr.mxu0 0.0
    %157 = vmatpush1.msra.mxu0 %v146
    %158 = vmatprep.subr.mxu0 0.0
    %159 = vmatpush1.msra.mxu0 %v145
    %160 = vmatprep.subr.mxu0 0.0
    %161 = vmatpush1.msra.mxu0 %v144
    %162 = vmatprep.subr.mxu0 0.0
    %163 = vmatpush1.msra.mxu0 %v143
    %164 = vmatprep.subr.mxu0 0.0
    %165 = vmatpush1.msra.mxu0 %v142
    %166 = vmatprep.subr.mxu0 0.0
    %167 = vmatpush1.msra.mxu0 %v141
    %168 = vmatprep.subr.mxu0 0.0
    %169 = vmatpush1.msra.mxu0 %v140
    %170 = vmatprep.subr.mxu0 0.0
    %171 = vmatpush1.msra.mxu0 %v139
    %172 = vmatprep.subr.mxu0 0.0
    %173 = vmatpush1.msra.mxu0 %v138
    %174 = vmatprep.subr.mxu0 0.0
    %175 = vmatpush1.msra.mxu0 %v137
    %176 = vmatprep.subr.mxu0 0.0
    %177 = vmatpush1.msra.mxu0 %v136
    %178 = vmatprep.subr.mxu0 0.0
    %179 = vmatpush1.msra.mxu0 %v135
    %180 = vmatprep.subr.mxu0 0.0
    %181 = vmatpush1.msra.mxu0 %v134
    %182 = vmatprep.subr.mxu0 0.0
    %183 = vmatpush2.msra.mxu0 0.0
    %184 = vmatprep.subr.mxu0 0.0
    %185 = vmatpush2.msra.mxu0 0.0
    %186 = vmatprep.subr.mxu0 0.0
    %187 = vmatpush2.msra.mxu0 0.0
    %188 = vmatprep.subr.mxu0 0.0
    %189 = vmatpush2.msra.mxu0 0.0
    %190 = vmatprep.subr.mxu0 0.0
    %191 = vmatpush2.msra.mxu0 0.0
    %192 = vmatprep.subr.mxu0 0.0
    %193 = vmatpush2.msra.mxu0 0.0
    %194 = vmatprep.subr.mxu0 0.0
    %195 = vmatpush2.msra.mxu0 0.0
    %196 = vmatprep.subr.mxu0 0.0
    %197 = vmatpush2.msra.mxu0 0.0
    %198 = vmatprep.subr.mxu0 0.0
    %199 = vmatpush2.msra.mxu0 0.0
    %200 = vmatprep.subr.mxu0 0.0
    %201 = vmatpush2.msra.mxu0 0.0
    %202 = vmatprep.subr.mxu0 0.0
    %203 = vmatpush2.msra.mxu0 0.0
    %204 = vmatprep.subr.mxu0 0.0
    %205 = vmatpush2.msra.mxu0 0.0
    %206 = vmatprep.subr.mxu0 0.0
    %207 = vmatpush2.msra.mxu0 0.0
    %208 = vmatprep.subr.mxu0 0.0
    %209 = vmatpush2.msra.mxu0 0.0
    %210 = vmatprep.subr.mxu0 0.0
    %211 = vmatpush2.msra.mxu0 0.0
    %212 = vmatprep.subr.mxu0 0.0
    %213 = vmatpush2.msra.mxu0 0.0
    %214 = vmatprep.mubr.f32.mxu0 0.0
    %215 = vmatmul.mubr.f32.gmra.mxu0 %v130
    %v216 = vpop.f32.mrf.mxu0
    %v217 = vadd.f32 0.0, %v216
    %v218 = vpop.f32.mrf.mxu0
    %219 = vmatprep.mubr.f32.mxu0 0.0
    %220 = vmatmul.mubr.f32.gmra.mxu0 %v131
    %v221 = vpop.f32.mrf.mxu0
    %v222 = vadd.f32 0.0, %v221
    %v223 = vpop.f32.mrf.mxu0
    %224 = vdwg.mxu0
    %v225 = vadd.f32 %v132, %v217
    %v226 = vadd.f32 %v133, %v222
    %227 = vst.msk [vmem:[#allocation2] sm:$0xff] %vm32, %v225
    %228 = vst.msk [vmem:[#allocation2 + $0x8] sm:$0xff] %vm32, %v226
    // Predicated region
    $region18: #{tpu_custom_call.1} parent=1 // pred_check
      _
    $region19: #{tpu_custom_call.1} parent=1 // pred_check_branch
      %230 = sbr.rel (0) target = $region21
    $region20: #{tpu_custom_call.1} parent=1 // pred_region
      %s232 = ssub.s32 256, 256
      %233 = vsyncadd [#allocation3], %s232
      %s234 = sshll.u32 [#allocation2], 4
      %s235 = int_to_ptr.vmem [resolvable:$true] %s234
      %240 = dma.vmem_to_hbm [thread:$0]  %s235, 256, %s3, [#allocation3], 128, 128, 8
    $region21: #{tpu_custom_call.1} parent=1 // pred_fallthru
      _
    // Predicated region
    $region22: #{tpu_custom_call.1} parent=1 // pred_check
      _
    $region23: #{tpu_custom_call.1} parent=1 // pred_check_branch
      %242 = sbr.rel (0) target = $region25
    $region24: #{tpu_custom_call.1} parent=1 // pred_region
      %243 = dma.done [#allocation3], 256
    $region25: #{tpu_custom_call.1} parent=1 // pred_fallthru
      _
    %244 = vsyncpa [#allocation3], 1

</llo_original>
